<compile_context>
chip_gen: v7x
topology: tpu7x:2x2x1
jax: 0.10.0
libtpu: 0.0.40
codegen_flags: <defaults>
</compile_context>

<pallas_src>
import functools

import jax
import jax.numpy as jnp
from jax.experimental import pallas as pl
from jax.experimental.pallas import tpu as pltpu


def _round_up(x, m):
    return ((x + m - 1) // m) * m


def _device_caps():
    """(is_v7, bf16_activation_ok, vmem_cap_bytes) from the default device kind."""
    try:
        kind = jax.devices()[0].device_kind.lower()
    except Exception:  # pragma: no cover - non-TPU / query failure
        kind = ""
    is_v7 = "v7" in kind
    bf16_act = ("v6" in kind) or is_v7          # v5e and older: no bf16 EUP/VPU
    vmem_cap = (48 if is_v7 else 96) * 1024 * 1024
    return is_v7, bf16_act, vmem_cap


def _value_kernel(n_hidden, act_dtype, *refs):
    """refs = (obs_ref, w0, b0, ..., w_{H-1}, b_{H-1}, w_last_row, b_last, out_ref).

    Hidden layers: bf16 MXU matmul (f32 accumulate) + f32 bias, activation in
    `act_dtype` (bf16 on v6e/v7x, f32 on v5e) feeding the next matmul directly.
    Final (out_features == 1) layer: f32 VPU multiply + lane reduce stored as a
    lane-dense (1, TILE_B) slab.
    """
    obs_ref = refs[0]
    out_ref = refs[-1]
    params = refs[1:-1]

    h = obs_ref[...]                                  # native dtype; first dot casts
    for i in range(n_hidden):
        w = params[2 * i][...]                        # (in, out)  bf16
        b = params[2 * i + 1][...]                    # (1, out)   f32
        z = jnp.dot(h.astype(jnp.bfloat16), w,
                    preferred_element_type=jnp.float32) + b
        h = jnp.tanh(z.astype(act_dtype))             # activation (tanh)

    # TODO(synk): experiment — move this contraction to the MXU via
    # lax.dot_general(w_row, h, (((1,), (1,)), ((), ()))) and keep whichever
    # variant avoids a physical vxpose of h in the Mosaic MLIR.
    w_row = params[2 * n_hidden][...]                 # (1, hidden_last) f32
    b_last = params[2 * n_hidden + 1][...]            # (1, 1)           f32
    v = jnp.sum(h.astype(jnp.float32) * w_row, axis=-1)[None, :] + b_last
    out_ref[...] = v.astype(out_ref.dtype)            # lane-dense (1, TILE_B)


def prepare_value_params(weights, biases):
    """One-time parameter prep (bf16 weights, (1,out) f32 biases) — do NOT redo per call."""
    n_hidden = len(weights) - 1
    params = []
    for li in range(n_hidden):
        params.append(jnp.asarray(weights[li], jnp.bfloat16))                # MXU input dtype
        params.append(jnp.asarray(biases[li], jnp.float32).reshape(1, -1))
    params.append(jnp.asarray(weights[-1], jnp.float32).reshape(1, -1))      # (1, hidden_last)
    params.append(jnp.asarray(biases[-1], jnp.float32).reshape(1, 1))        # (1, 1)
    return tuple(params)


def value_forward(obs, params, *, max_tile_b=1024):
    """Pallas implementation of Value.forward(obs) == squeeze(v_net(obs), -1)."""
    batch, obs_dim = obs.shape
    n_hidden = len(params) // 2 - 1
    is_v7, bf16_act, vmem_cap = _device_caps()
    act_dtype = jnp.bfloat16 if bf16_act else jnp.float32

    # Pad only to the next multiple of 128; pick the largest tile that divides it.
    padded = _round_up(batch, 128)
    max_tile_b = max(128, int(max_tile_b))
    candidates = [c for c in (1024, 512, 256, 128)
                  if c <= max_tile_b and padded % c == 0]
    tile_b = candidates[0] if candidates else 128
    if is_v7:
        # Make sure the "parallel" axis has >= 2 steps so both TensorCores work.
        while padded // tile_b < 2 and tile_b > 128:
            tile_b //= 2

    obs_p = obs if padded == batch else jnp.pad(obs, ((0, padded - batch), (0, 0)))
    grid = (padded // tile_b,)

    # Advisory cost estimate for the XLA scheduler.
    flops = 0
    transcendentals = 0
    for li in range(n_hidden):
        in_d, out_d = params[2 * li].shape
        flops += 2 * padded * in_d * out_d
        transcendentals += padded * out_d
    flops += 2 * padded * int(params[2 * n_hidden].shape[1])
    param_bytes = sum(int(p.size) * p.dtype.itemsize for p in params)
    bytes_accessed = (obs_p.size * obs_p.dtype.itemsize + param_bytes + padded * 4)
    ce = pl.CostEstimate(flops=flops, transcendentals=transcendentals,
                         bytes_accessed=bytes_accessed)

    def run(single_buffer_weights):
        in_specs = [pl.BlockSpec((tile_b, obs_dim), lambda i: (i, 0))]
        for p in params:
            if single_buffer_weights:
                # Constant block index -> stays VMEM-resident; one buffer is enough.
                in_specs.append(pl.BlockSpec(p.shape, lambda i: (0, 0),
                                             pipeline_mode=pl.Buffered(1)))
            else:
                in_specs.append(pl.BlockSpec(p.shape, lambda i: (0, 0)))

        weight_bufs = 1 if single_buffer_weights else 2
        need = (2 * tile_b * obs_dim * obs_p.dtype.itemsize     # obs double buffer
                + 2 * tile_b * 4                                # output double buffer
                + weight_bufs * param_bytes                     # resident params
                + 4 * 1024 * 1024)                              # compiler scratch headroom
        vmem_limit = int(min(max(need, 32 * 1024 * 1024), vmem_cap))

        out = pl.pallas_call(
            functools.partial(_value_kernel, n_hidden, act_dtype),
            out_shape=jax.ShapeDtypeStruct((1, padded), jnp.float32),
            grid=grid,
            in_specs=in_specs,
            out_specs=pl.BlockSpec((1, tile_b), lambda i: (0, i)),
            compiler_params=pltpu.CompilerParams(
                dimension_semantics=("parallel",),
                vmem_limit_bytes=vmem_limit),
            cost_estimate=ce,
        )(obs_p, *params)
        return jax.block_until_ready(out)

    try:
        out = run(True)
    except Exception:
        # Fallback: installed JAX may not support pipeline_mode on pallas_call.
        out = run(False)

    # torch.squeeze(v, -1): slice off padding; one value per row.
    return out[0, :batch]


def init_value_params(obs_dim, hidden_sizes, key):
    """Deterministic synthetic init matching Value.__init__ layer shapes."""
    hid = [hidden_sizes] if isinstance(hidden_sizes, int) else list(hidden_sizes)
    sizes = [obs_dim] + hid + [1]
    weights, biases = [], []
    for j in range(len(sizes) - 1):
        key, wk, bk = jax.random.split(key, 3)
        bound = 1.0 / jnp.sqrt(sizes[j])
        w = jax.random.uniform(wk, (sizes[j], sizes[j + 1]),
                               minval=-bound, maxval=bound, dtype=jnp.float32)
        b = jax.random.uniform(bk, (sizes[j + 1],),
                               minval=-bound, maxval=bound, dtype=jnp.float32)
        weights.append(w)
        biases.append(b)
    return weights, biases


def value_reference(obs, weights, biases, match_kernel=False, act_dtype=jnp.float32):
    """Pure-JAX reference of the PyTorch forward (optionally matched to kernel dtypes)."""
    h = jnp.asarray(obs, jnp.float32)
    n = len(weights)
    for i, (w, b) in enumerate(zip(weights, biases)):
        if i < n - 1:
            if match_kernel:
                z = jnp.dot(h.astype(jnp.bfloat16), w.astype(jnp.bfloat16),
                            preferred_element_type=jnp.float32) + b
                h = jnp.tanh(z.astype(act_dtype)).astype(jnp.float32)
            else:
                h = jnp.tanh(jnp.dot(h, w) + b)
        else:
            h = jnp.dot(h, w.astype(jnp.float32)) + b
    return jnp.squeeze(h, axis=-1)


if __name__ == "__main__":
    key = jax.random.PRNGKey(0)
    batch, obs_dim = 8, 16
    hidden_sizes = (32, 32)      # activation = tanh (typical for this repo)
    # TODO(synk): `activation` is a module constructor arg; tanh is hard-wired here.

    k_obs, k_params = jax.random.split(key)
    obs = jax.random.normal(k_obs, (batch, obs_dim), dtype=jnp.float32)
    weights, biases = init_value_params(obs_dim, hidden_sizes, k_params)
    params = prepare_value_params(weights, biases)   # one-time bf16 cast / reshape

    v = value_forward(obs, params)
    v = jax.block_until_ready(v)
    assert v.shape == (batch,), v.shape

    act_dtype = jnp.bfloat16 if _device_caps()[1] else jnp.float32
    v_match = value_reference(obs, weights, biases, match_kernel=True,
                              act_dtype=act_dtype)
    assert jnp.allclose(v, v_match, atol=5e-3, rtol=5e-3), (v, v_match)

    v_f32 = value_reference(obs, weights, biases, match_kernel=False)
    assert jnp.allclose(v, v_f32, atol=5e-2, rtol=5e-2), (v, v_f32)

    print("KERNEL_OK")
</pallas_src>

<mosaic_0001>
module attributes {stable_mosaic.version = 11 : i64} {
  func.func @_value_kernel(%arg0: i32, %arg1: memref<128x16xf32, #tpu.memory_space<vmem>>, %arg2: memref<16x32xbf16, #tpu.memory_space<vmem>>, %arg3: memref<1x32xf32, #tpu.memory_space<vmem>>, %arg4: memref<32x32xbf16, #tpu.memory_space<vmem>>, %arg5: memref<1x32xf32, #tpu.memory_space<vmem>>, %arg6: memref<1x32xf32, #tpu.memory_space<vmem>>, %arg7: memref<1x1xf32, #tpu.memory_space<vmem>>, %arg8: memref<1x128xf32, #tpu.memory_space<vmem>>) attributes {dimension_semantics = [#tpu.dimension_semantics<parallel>], iteration_bounds = array<i64: 1>, scalar_prefetch = 0 : i64, scratch_operands = 0 : i64, tpu.core_type = #tpu.core_type<tc>, window_params = [{transform_indices = @transform_0, window_bounds = array<i64: 128, 16>}, {pipeline_mode = #tpu.pipeline_mode<synchronous>, transform_indices = @transform_1, window_bounds = array<i64: 16, 32>}, {pipeline_mode = #tpu.pipeline_mode<synchronous>, transform_indices = @transform_2, window_bounds = array<i64: 1, 32>}, {pipeline_mode = #tpu.pipeline_mode<synchronous>, transform_indices = @transform_3, window_bounds = array<i64: 32, 32>}, {pipeline_mode = #tpu.pipeline_mode<synchronous>, transform_indices = @transform_4, window_bounds = array<i64: 1, 32>}, {pipeline_mode = #tpu.pipeline_mode<synchronous>, transform_indices = @transform_5, window_bounds = array<i64: 1, 32>}, {pipeline_mode = #tpu.pipeline_mode<synchronous>, transform_indices = @transform_6, window_bounds = array<i64: 1, 1>}, {transform_indices = @transform_7, window_bounds = array<i64: 1, 128>}]} {
    %c0 = arith.constant 0 : index
    %c0_0 = arith.constant 0 : index
    %0 = vector.load %arg1[%c0, %c0_0] : memref<128x16xf32, #tpu.memory_space<vmem>>, vector<128x16xf32>
    %c0_1 = arith.constant 0 : index
    %c0_2 = arith.constant 0 : index
    %1 = vector.load %arg2[%c0_1, %c0_2] : memref<16x32xbf16, #tpu.memory_space<vmem>>, vector<16x32xbf16>
    %c0_3 = arith.constant 0 : index
    %c0_4 = arith.constant 0 : index
    %2 = vector.load %arg3[%c0_3, %c0_4] : memref<1x32xf32, #tpu.memory_space<vmem>>, vector<1x32xf32>
    %3 = arith.truncf %0 : vector<128x16xf32> to vector<128x16xbf16>
    %cst = arith.constant dense<0.000000e+00> : vector<128x32xf32>
    %4 = tpu.matmul %3, %1, %cst {dimension_numbers = #tpu.dot_dimension_numbers<[1], [0], [0], [1], [0, 0, 1, 1], [], []>} : vector<128x16xbf16>, vector<16x32xbf16>, vector<128x32xf32> -> vector<128x32xf32>
    %5 = vector.broadcast %2 : vector<1x32xf32> to vector<128x32xf32>
    %6 = arith.addf %4, %5 : vector<128x32xf32>
    %7 = math.tanh %6 : vector<128x32xf32>
    %c0_5 = arith.constant 0 : index
    %c0_6 = arith.constant 0 : index
    %8 = vector.load %arg4[%c0_5, %c0_6] : memref<32x32xbf16, #tpu.memory_space<vmem>>, vector<32x32xbf16>
    %c0_7 = arith.constant 0 : index
    %c0_8 = arith.constant 0 : index
    %9 = vector.load %arg5[%c0_7, %c0_8] : memref<1x32xf32, #tpu.memory_space<vmem>>, vector<1x32xf32>
    %10 = arith.truncf %7 : vector<128x32xf32> to vector<128x32xbf16>
    %cst_9 = arith.constant dense<0.000000e+00> : vector<128x32xf32>
    %11 = tpu.matmul %10, %8, %cst_9 {dimension_numbers = #tpu.dot_dimension_numbers<[1], [0], [0], [1], [0, 0, 1, 1], [], []>} : vector<128x32xbf16>, vector<32x32xbf16>, vector<128x32xf32> -> vector<128x32xf32>
    %12 = vector.broadcast %9 : vector<1x32xf32> to vector<128x32xf32>
    %13 = arith.addf %11, %12 : vector<128x32xf32>
    %14 = math.tanh %13 : vector<128x32xf32>
    %c0_10 = arith.constant 0 : index
    %c0_11 = arith.constant 0 : index
    %15 = vector.load %arg6[%c0_10, %c0_11] : memref<1x32xf32, #tpu.memory_space<vmem>>, vector<1x32xf32>
    %c0_12 = arith.constant 0 : index
    %c0_13 = arith.constant 0 : index
    %16 = vector.load %arg7[%c0_12, %c0_13] : memref<1x1xf32, #tpu.memory_space<vmem>>, vector<1x1xf32>
    %17 = vector.broadcast %15 : vector<1x32xf32> to vector<128x32xf32>
    %18 = arith.mulf %14, %17 : vector<128x32xf32>
    %cst_14 = arith.constant dense<0.000000e+00> : vector<128xf32>
    %19 = vector.multi_reduction <add>, %18, %cst_14 [1] : vector<128x32xf32> to vector<128xf32>
    %20 = vector.shape_cast %19 : vector<128xf32> to vector<1x128xf32>
    %21 = vector.broadcast %16 : vector<1x1xf32> to vector<1x128xf32>
    %22 = arith.addf %20, %21 : vector<1x128xf32>
    %c0_15 = arith.constant 0 : index
    %c0_16 = arith.constant 0 : index
    %23 = vector.load %arg8[%c0_15, %c0_16] : memref<1x128xf32, #tpu.memory_space<vmem>>, vector<1x128xf32>
    tpu.vector_store %arg8[%c0_15, %c0_16], %22 {strides = array<i32>} : memref<1x128xf32, #tpu.memory_space<vmem>>, vector<1x128xf32>,
    return
  }
  func.func @transform_0(%arg0: i32) -> (i32, i32) {
    %c0_i32 = arith.constant 0 : i32
    %c0_i32_0 = arith.constant 0 : i32
    return %arg0, %c0_i32 : i32, i32
  }
  func.func @transform_1(%arg0: i32) -> (i32, i32) {
    %c0_i32 = arith.constant 0 : i32
    %c0_i32_0 = arith.constant 0 : i32
    %c0_i32_1 = arith.constant 0 : i32
    return %c0_i32, %c0_i32_0 : i32, i32
  }
  func.func @transform_2(%arg0: i32) -> (i32, i32) {
    %c0_i32 = arith.constant 0 : i32
    %c0_i32_0 = arith.constant 0 : i32
    %c0_i32_1 = arith.constant 0 : i32
    return %c0_i32, %c0_i32_0 : i32, i32
  }
  func.func @transform_3(%arg0: i32) -> (i32, i32) {
    %c0_i32 = arith.constant 0 : i32
    %c0_i32_0 = arith.constant 0 : i32
    %c0_i32_1 = arith.constant 0 : i32
    return %c0_i32, %c0_i32_0 : i32, i32
  }
  func.func @transform_4(%arg0: i32) -> (i32, i32) {
    %c0_i32 = arith.constant 0 : i32
    %c0_i32_0 = arith.constant 0 : i32
    %c0_i32_1 = arith.constant 0 : i32
    return %c0_i32, %c0_i32_0 : i32, i32
  }
  func.func @transform_5(%arg0: i32) -> (i32, i32) {
    %c0_i32 = arith.constant 0 : i32
    %c0_i32_0 = arith.constant 0 : i32
    %c0_i32_1 = arith.constant 0 : i32
    return %c0_i32, %c0_i32_0 : i32, i32
  }
  func.func @transform_6(%arg0: i32) -> (i32, i32) {
    %c0_i32 = arith.constant 0 : i32
    %c0_i32_0 = arith.constant 0 : i32
    %c0_i32_1 = arith.constant 0 : i32
    return %c0_i32, %c0_i32_0 : i32, i32
  }
  func.func @transform_7(%arg0: i32) -> (i32, i32) {
    %c0_i32 = arith.constant 0 : i32
    %c0_i32_0 = arith.constant 0 : i32
    return %c0_i32, %arg0 : i32, i32
  }
}

module attributes {stable_mosaic.version = 11 : i64} {
  func.func @_value_kernel(%arg0: i32, %arg1: memref<128x16xf32, #tpu.memory_space<vmem>>, %arg2: memref<16x32xbf16, #tpu.memory_space<vmem>>, %arg3: memref<1x32xf32, #tpu.memory_space<vmem>>, %arg4: memref<32x32xbf16, #tpu.memory_space<vmem>>, %arg5: memref<1x32xf32, #tpu.memory_space<vmem>>, %arg6: memref<1x32xf32, #tpu.memory_space<vmem>>, %arg7: memref<1x1xf32, #tpu.memory_space<vmem>>, %arg8: memref<1x128xf32, #tpu.memory_space<vmem>>) attributes {dimension_semantics = [#tpu.dimension_semantics<parallel>], iteration_bounds = array<i64: 1>, scalar_prefetch = 0 : i64, scratch_operands = 0 : i64, tpu.core_type = #tpu.core_type<tc>, window_params = [{transform_indices = @transform_0, window_bounds = array<i64: 128, 16>}, {pipeline_mode = #tpu.pipeline_mode<synchronous>, transform_indices = @transform_1, window_bounds = array<i64: 16, 32>}, {pipeline_mode = #tpu.pipeline_mode<synchronous>, transform_indices = @transform_2, window_bounds = array<i64: 1, 32>}, {pipeline_mode = #tpu.pipeline_mode<synchronous>, transform_indices = @transform_3, window_bounds = array<i64: 32, 32>}, {pipeline_mode = #tpu.pipeline_mode<synchronous>, transform_indices = @transform_4, window_bounds = array<i64: 1, 32>}, {pipeline_mode = #tpu.pipeline_mode<synchronous>, transform_indices = @transform_5, window_bounds = array<i64: 1, 32>}, {pipeline_mode = #tpu.pipeline_mode<synchronous>, transform_indices = @transform_6, window_bounds = array<i64: 1, 1>}, {transform_indices = @transform_7, window_bounds = array<i64: 1, 128>}]} {
    %c0 = arith.constant 0 : index
    %c0_0 = arith.constant 0 : index
    %0 = vector.load %arg1[%c0, %c0_0] : memref<128x16xf32, #tpu.memory_space<vmem>>, vector<128x16xf32>
    %c0_1 = arith.constant 0 : index
    %c0_2 = arith.constant 0 : index
    %1 = vector.load %arg2[%c0_1, %c0_2] : memref<16x32xbf16, #tpu.memory_space<vmem>>, vector<16x32xbf16>
    %c0_3 = arith.constant 0 : index
    %c0_4 = arith.constant 0 : index
    %2 = vector.load %arg3[%c0_3, %c0_4] : memref<1x32xf32, #tpu.memory_space<vmem>>, vector<1x32xf32>
    %3 = arith.truncf %0 : vector<128x16xf32> to vector<128x16xbf16>
    %cst = arith.constant dense<0.000000e+00> : vector<128x32xf32>
    %4 = tpu.matmul %3, %1, %cst {dimension_numbers = #tpu.dot_dimension_numbers<[1], [0], [0], [1], [0, 0, 1, 1], [], []>} : vector<128x16xbf16>, vector<16x32xbf16>, vector<128x32xf32> -> vector<128x32xf32>
    %5 = vector.broadcast %2 : vector<1x32xf32> to vector<128x32xf32>
    %6 = arith.addf %4, %5 : vector<128x32xf32>
    %7 = math.tanh %6 : vector<128x32xf32>
    %c0_5 = arith.constant 0 : index
    %c0_6 = arith.constant 0 : index
    %8 = vector.load %arg4[%c0_5, %c0_6] : memref<32x32xbf16, #tpu.memory_space<vmem>>, vector<32x32xbf16>
    %c0_7 = arith.constant 0 : index
    %c0_8 = arith.constant 0 : index
    %9 = vector.load %arg5[%c0_7, %c0_8] : memref<1x32xf32, #tpu.memory_space<vmem>>, vector<1x32xf32>
    %10 = arith.truncf %7 : vector<128x32xf32> to vector<128x32xbf16>
    %cst_9 = arith.constant dense<0.000000e+00> : vector<128x32xf32>
    %11 = tpu.matmul %10, %8, %cst_9 {dimension_numbers = #tpu.dot_dimension_numbers<[1], [0], [0], [1], [0, 0, 1, 1], [], []>} : vector<128x32xbf16>, vector<32x32xbf16>, vector<128x32xf32> -> vector<128x32xf32>
    %12 = vector.broadcast %9 : vector<1x32xf32> to vector<128x32xf32>
    %13 = arith.addf %11, %12 : vector<128x32xf32>
    %14 = math.tanh %13 : vector<128x32xf32>
    %c0_10 = arith.constant 0 : index
    %c0_11 = arith.constant 0 : index
    %15 = vector.load %arg6[%c0_10, %c0_11] : memref<1x32xf32, #tpu.memory_space<vmem>>, vector<1x32xf32>
    %c0_12 = arith.constant 0 : index
    %c0_13 = arith.constant 0 : index
    %16 = vector.load %arg7[%c0_12, %c0_13] : memref<1x1xf32, #tpu.memory_space<vmem>>, vector<1x1xf32>
    %17 = vector.broadcast %15 : vector<1x32xf32> to vector<128x32xf32>
    %18 = arith.mulf %14, %17 : vector<128x32xf32>
    %cst_14 = arith.constant dense<0.000000e+00> : vector<128xf32>
    %19 = vector.multi_reduction <add>, %18, %cst_14 [1] : vector<128x32xf32> to vector<128xf32>
    %20 = vector.shape_cast %19 : vector<128xf32> to vector<1x128xf32>
    %21 = vector.broadcast %16 : vector<1x1xf32> to vector<1x128xf32>
    %22 = arith.addf %20, %21 : vector<1x128xf32>
    %c0_15 = arith.constant 0 : index
    %c0_16 = arith.constant 0 : index
    %23 = vector.load %arg8[%c0_15, %c0_16] : memref<1x128xf32, #tpu.memory_space<vmem>>, vector<1x128xf32>
    tpu.vector_store %arg8[%c0_15, %c0_16], %22 {strides = array<i32>} : memref<1x128xf32, #tpu.memory_space<vmem>>, vector<1x128xf32>,
    return
  }
  func.func @transform_0(%arg0: i32) -> (i32, i32) {
    %c0_i32 = arith.constant 0 : i32
    %c0_i32_0 = arith.constant 0 : i32
    return %arg0, %c0_i32 : i32, i32
  }
  func.func @transform_1(%arg0: i32) -> (i32, i32) {
    %c0_i32 = arith.constant 0 : i32
    %c0_i32_0 = arith.constant 0 : i32
    %c0_i32_1 = arith.constant 0 : i32
    return %c0_i32, %c0_i32_0 : i32, i32
  }
  func.func @transform_2(%arg0: i32) -> (i32, i32) {
    %c0_i32 = arith.constant 0 : i32
    %c0_i32_0 = arith.constant 0 : i32
    %c0_i32_1 = arith.constant 0 : i32
    return %c0_i32, %c0_i32_0 : i32, i32
  }
  func.func @transform_3(%arg0: i32) -> (i32, i32) {
    %c0_i32 = arith.constant 0 : i32
    %c0_i32_0 = arith.constant 0 : i32
    %c0_i32_1 = arith.constant 0 : i32
    return %c0_i32, %c0_i32_0 : i32, i32
  }
  func.func @transform_4(%arg0: i32) -> (i32, i32) {
    %c0_i32 = arith.constant 0 : i32
    %c0_i32_0 = arith.constant 0 : i32
    %c0_i32_1 = arith.constant 0 : i32
    return %c0_i32, %c0_i32_0 : i32, i32
  }
  func.func @transform_5(%arg0: i32) -> (i32, i32) {
    %c0_i32 = arith.constant 0 : i32
    %c0_i32_0 = arith.constant 0 : i32
    %c0_i32_1 = arith.constant 0 : i32
    return %c0_i32, %c0_i32_0 : i32, i32
  }
  func.func @transform_6(%arg0: i32) -> (i32, i32) {
    %c0_i32 = arith.constant 0 : i32
    %c0_i32_0 = arith.constant 0 : i32
    %c0_i32_1 = arith.constant 0 : i32
    return %c0_i32, %c0_i32_0 : i32, i32
  }
  func.func @transform_7(%arg0: i32) -> (i32, i32) {
    %c0_i32 = arith.constant 0 : i32
    %c0_i32_0 = arith.constant 0 : i32
    return %c0_i32, %arg0 : i32, i32
  }
}

</mosaic_0001>

<llo_original>
// kernel: tpu_custom_call.1
$region0: #{tpu_custom_call.1}
  #allocation0 [shape = 'u32[]', space=smem, size = 0x4, offset = 0x4, fixed_abs, tag = 'smem constant byte address 0x4 - core index']
  #allocation1 [shape = 'u32[144,128]{1,0:T(1,128)}', space=vmem, size = 0x12000, scoped, tag = 'internal scratch']
  #allocation2 [shape = 'f32[1,1]{1,0:T(1,128)S(1)}', space=vmem, size = 0x200, scoped, tag = 'scoped memory for tpu_custom_call.1']
  %s0 = inlined_call_operand.vmem [shape: f32[128,16], index: 0, kind: input, shape index: {}]
  %s1 = inlined_call_operand.vmem [shape: bf16[16,32], index: 1, kind: input, shape index: {}]
  %s2 = inlined_call_operand.vmem [shape: f32[1,32], index: 2, kind: input, shape index: {}]
  %s3 = inlined_call_operand.vmem [shape: bf16[32,32], index: 3, kind: input, shape index: {}]
  %s4 = inlined_call_operand.vmem [shape: f32[1,32], index: 4, kind: input, shape index: {}]
  %s5 = inlined_call_operand.vmem [shape: f32[1,32], index: 5, kind: input, shape index: {}]
  %s6 = inlined_call_operand.<no memory space> [shape: f32[1,1], index: 6, kind: input, shape index: {}]
  %s7 = inlined_call_operand.hbm [shape: f32[1,128], index: 7, kind: output, shape index: {}]
  %s8 = sld [smem:[#allocation0]]
  $region38: #{tpu_custom_call.1} parent=0
    _
  %s10 = ssub.s32 1, %s8
  %s11 = scalar_select 0, %s10, %s8
  %v12 = vstv %s6
  %13 = vst [vmem:[#allocation2] sm:$0x1] %v12
  $region1: #{tpu_custom_call.1} parent=0
    #allocation3 [shape = 'u8[512]{0}', space=vmem, size = 0x400, scoped, tag = 'output window, operand 0, single buffered']
    #allocation4 [shape = 's32[1]{0}', space=sflag, size = 0x4, scoped, tag = 'scoped memory for tpu_custom_call.1']
    %14 = vsyncpa [#allocation4], 0
    // Predicated region
    $region2: #{tpu_custom_call.1} parent=1 // pred_check
      _
    $region3: #{tpu_custom_call.1} parent=1 // pred_check_branch
      %16 = sbr.rel (0) target = $region5
    $region4: #{tpu_custom_call.1} parent=1 // pred_region
      _
    $region5: #{tpu_custom_call.1} parent=1 // pred_fallthru
      _
    // Predicated region
    $region6: #{tpu_custom_call.1} parent=1 // pred_check
      _
    $region7: #{tpu_custom_call.1} parent=1 // pred_check_branch
      %18 = sbr.rel (0) target = $region9
    $region8: #{tpu_custom_call.1} parent=1 // pred_region
      _
    $region9: #{tpu_custom_call.1} parent=1 // pred_fallthru
      _
    // Predicated region
    $region10: #{tpu_custom_call.1} parent=1 // pred_check
      _
    $region11: #{tpu_custom_call.1} parent=1 // pred_check_branch
      %20 = sbr.rel (0) target = $region13
    $region12: #{tpu_custom_call.1} parent=1 // pred_region
      _
    $region13: #{tpu_custom_call.1} parent=1 // pred_fallthru
      _
    // Predicated region
    $region14: #{tpu_custom_call.1} parent=1 // pred_check
      _
    $region15: #{tpu_custom_call.1} parent=1 // pred_check_branch
      %22 = sbr.rel (0) target = $region17
    $region16: #{tpu_custom_call.1} parent=1 // pred_region
      _
    $region17: #{tpu_custom_call.1} parent=1 // pred_fallthru
      _
    // Predicated region
    $region18: #{tpu_custom_call.1} parent=1 // pred_check
      _
    $region19: #{tpu_custom_call.1} parent=1 // pred_check_branch
      %24 = sbr.rel (0) target = $region21
    $region20: #{tpu_custom_call.1} parent=1 // pred_region
      _
    $region21: #{tpu_custom_call.1} parent=1 // pred_fallthru
      _
    // Predicated region
    $region22: #{tpu_custom_call.1} parent=1 // pred_check
      _
    $region23: #{tpu_custom_call.1} parent=1 // pred_check_branch
      %26 = sbr.rel (0) target = $region25
    $region24: #{tpu_custom_call.1} parent=1 // pred_region
      _
    $region25: #{tpu_custom_call.1} parent=1 // pred_fallthru
      _
    // Predicated region
    $region26: #{tpu_custom_call.1} parent=1 // pred_check
      _
    $region27: #{tpu_custom_call.1} parent=1 // pred_check_branch
      %28 = sbr.rel (0) target = $region29
    $region28: #{tpu_custom_call.1} parent=1 // pred_region
      _
    $region29: #{tpu_custom_call.1} parent=1 // pred_fallthru
      _
    %v30 = vld [vmem:[%s0] sm:$0xff]
    %v31 = vld [vmem:[%s0 + $0x8] sm:$0xff]
    %v32 = vld [vmem:[%s0 + $0x10] sm:$0xff]
    %v33 = vld [vmem:[%s0 + $0x18] sm:$0xff]
    %v34 = vld [vmem:[%s0 + $0x20] sm:$0xff]
    %v35 = vld [vmem:[%s0 + $0x28] sm:$0xff]
    %v36 = vld [vmem:[%s0 + $0x30] sm:$0xff]
    %v37 = vld [vmem:[%s0 + $0x38] sm:$0xff]
    %v38 = vld [vmem:[%s0 + $0x40] sm:$0xff]
    %v39 = vld [vmem:[%s0 + $0x48] sm:$0xff]
    %v40 = vld [vmem:[%s0 + $0x50] sm:$0xff]
    %v41 = vld [vmem:[%s0 + $0x58] sm:$0xff]
    %v42 = vld [vmem:[%s0 + $0x60] sm:$0xff]
    %v43 = vld [vmem:[%s0 + $0x68] sm:$0xff]
    %v44 = vld [vmem:[%s0 + $0x70] sm:$0xff]
    %v45 = vld [vmem:[%s0 + $0x78] sm:$0xff]
    %v46 = vld [vmem:[%s1] sm:$0xf]
    %v47 = vld [vmem:[%s1 + $0x4] sm:$0xf]
    %v48 = vld [vmem:[%s2] sm:$0x1]
    %v49 = vpack.c.bf16 %v31, %v30
    %v50 = vpack.c.bf16 %v33, %v32
    %v51 = vpack.c.bf16 %v35, %v34
    %v52 = vpack.c.bf16 %v37, %v36
    %v53 = vpack.c.bf16 %v39, %v38
    %v54 = vpack.c.bf16 %v41, %v40
    %v55 = vpack.c.bf16 %v43, %v42
    %v56 = vpack.c.bf16 %v45, %v44
    %v58 = vlaneseq
    %v59 = vshrl.u32 %v58, 7
    %v60 = vsub.s32 0, %v59
    %v61 = vrot.slane %v48, %v60
    %v65 = vunpack.c.l.b16 %v46
    %v66 = vunpack.c.l.b16 %v47
    %v67 = vpack.c.b16 %v66, %v65
    %vm69 = vcmask 130048
    %v71 = vsel %vm69, %v49, 0
    %v74 = vsel %vm69, %v50, 0
    %v77 = vsel %vm69, %v51, 0
    %v80 = vsel %vm69, %v52, 0
    %v83 = vsel %vm69, %v53, 0
    %v86 = vsel %vm69, %v54, 0
    %v89 = vsel %vm69, %v55, 0
    %v92 = vsel %vm69, %v56, 0
    %94 = vmatprep.subr.bf16.mxu0 0
    %95 = vmatpush1.bf16.msra.mxu0 %v67
    %96 = vmatprep.subr.bf16.mxu0 0
    %97 = vmatpush1.bf16.msra.mxu0 0
    %98 = vmatprep.subr.bf16.mxu0 0
    %99 = vmatpush1.bf16.msra.mxu0 0
    %100 = vmatprep.subr.bf16.mxu0 0
    %101 = vmatpush1.bf16.msra.mxu0 0
    %102 = vmatprep.subr.bf16.mxu0 0
    %103 = vmatpush1.bf16.msra.mxu0 0
    %104 = vmatprep.subr.bf16.mxu0 0
    %105 = vmatpush1.bf16.msra.mxu0 0
    %106 = vmatprep.subr.bf16.mxu0 0
    %107 = vmatpush1.bf16.msra.mxu0 0
    %108 = vmatprep.subr.bf16.mxu0 0
    %109 = vmatpush1.bf16.msra.mxu0 0
    %110 = vmatprep.subr.bf16.mxu0 0
    %111 = vmatpush1.bf16.msra.mxu0 0
    %112 = vmatprep.subr.bf16.mxu0 0
    %113 = vmatpush1.bf16.msra.mxu0 0
    %114 = vmatprep.subr.bf16.mxu0 0
    %115 = vmatpush1.bf16.msra.mxu0 0
    %116 = vmatprep.subr.bf16.mxu0 0
    %117 = vmatpush1.bf16.msra.mxu0 0
    %118 = vmatprep.subr.bf16.mxu0 0
    %119 = vmatpush1.bf16.msra.mxu0 0
    %120 = vmatprep.subr.bf16.mxu0 0
    %121 = vmatpush1.bf16.msra.mxu0 0
    %122 = vmatprep.subr.bf16.mxu0 0
    %123 = vmatpush1.bf16.msra.mxu0 0
    %124 = vmatprep.subr.bf16.mxu0 0
    %125 = vmatpush1.bf16.msra.mxu0 0
    %126 = vmatprep.mubr.bf16.mxu0 0
    %127 = vmatmul.mubr.bf16.gmra.mrb[0].mxu0 %v71
    %v128 = vpop.f32.mrb[0].mxu0
    %v129 = vadd.f32 %v61, %v128
    %v130 = vpop.f32.mrb[0].mxu0
    %v131 = vpop.f32.mrb[0].mxu0
    %v132 = vadd.f32 %v61, %v131
    %v133 = vpop.f32.mrb[0].mxu0
    %134 = vmatprep.mubr.bf16.mxu0 0
    %135 = vmatmul.mubr.bf16.gmra.mrb[0].mxu0 %v74
    %v136 = vpop.f32.mrb[0].mxu0
    %v137 = vadd.f32 %v61, %v136
    %v138 = vpop.f32.mrb[0].mxu0
    %v139 = vpop.f32.mrb[0].mxu0
    %v140 = vadd.f32 %v61, %v139
    %v141 = vpop.f32.mrb[0].mxu0
    %142 = vmatprep.mubr.bf16.mxu0 0
    %143 = vmatmul.mubr.bf16.gmra.mrb[0].mxu0 %v77
    %v144 = vpop.f32.mrb[0].mxu0
    %v145 = vadd.f32 %v61, %v144
    %v146 = vpop.f32.mrb[0].mxu0
    %v147 = vpop.f32.mrb[0].mxu0
    %v148 = vadd.f32 %v61, %v147
    %v149 = vpop.f32.mrb[0].mxu0
    %150 = vmatprep.mubr.bf16.mxu0 0
    %151 = vmatmul.mubr.bf16.gmra.mrb[0].mxu0 %v80
    %v152 = vpop.f32.mrb[0].mxu0
    %v153 = vadd.f32 %v61, %v152
    %v154 = vpop.f32.mrb[0].mxu0
    %v155 = vpop.f32.mrb[0].mxu0
    %v156 = vadd.f32 %v61, %v155
    %v157 = vpop.f32.mrb[0].mxu0
    %158 = vmatprep.mubr.bf16.mxu0 0
    %159 = vmatmul.mubr.bf16.gmra.mrb[0].mxu0 %v83
    %v160 = vpop.f32.mrb[0].mxu0
    %v161 = vadd.f32 %v61, %v160
    %v162 = vpop.f32.mrb[0].mxu0
    %v163 = vpop.f32.mrb[0].mxu0
    %v164 = vadd.f32 %v61, %v163
    %v165 = vpop.f32.mrb[0].mxu0
    %166 = vmatprep.mubr.bf16.mxu0 0
    %167 = vmatmul.mubr.bf16.gmra.mrb[0].mxu0 %v86
    %v168 = vpop.f32.mrb[0].mxu0
    %v169 = vadd.f32 %v61, %v168
    %v170 = vpop.f32.mrb[0].mxu0
    %v171 = vpop.f32.mrb[0].mxu0
    %v172 = vadd.f32 %v61, %v171
    %v173 = vpop.f32.mrb[0].mxu0
    %174 = vmatprep.mubr.bf16.mxu0 0
    %175 = vmatmul.mubr.bf16.gmra.mrb[0].mxu0 %v89
    %v176 = vpop.f32.mrb[0].mxu0
    %v177 = vadd.f32 %v61, %v176
    %v178 = vpop.f32.mrb[0].mxu0
    %v179 = vpop.f32.mrb[0].mxu0
    %v180 = vadd.f32 %v61, %v179
    %v181 = vpop.f32.mrb[0].mxu0
    %182 = vmatprep.mubr.bf16.mxu0 0
    %183 = vmatmul.mubr.bf16.gmra.mrb[0].mxu0 %v92
    %v184 = vpop.f32.mrb[0].mxu0
    %v185 = vadd.f32 %v61, %v184
    %v186 = vpop.f32.mrb[0].mxu0
    %v187 = vpop.f32.mrb[0].mxu0
    %v188 = vadd.f32 %v61, %v187
    %v189 = vpop.f32.mrb[0].mxu0
    %190 = vdwg.mxu0
    %v191 = vtanh.pop %v129
    %v192 = vtanh.pop %v132
    %v193 = vtanh.pop %v137
    %v194 = vtanh.pop %v140
    %v195 = vtanh.pop %v145
    %v196 = vtanh.pop %v148
    %v197 = vtanh.pop %v153
    %v198 = vtanh.pop %v156
    %v199 = vtanh.pop %v161
    %v200 = vtanh.pop %v164
    %v201 = vtanh.pop %v169
    %v202 = vtanh.pop %v172
    %v203 = vtanh.pop %v177
    %v204 = vtanh.pop %v180
    %v205 = vtanh.pop %v185
    %v206 = vtanh.pop %v188
    %v207 = vld [vmem:[%s3] sm:$0xf]
    %v208 = vld [vmem:[%s3 + $0x4] sm:$0xf]
    %v209 = vld [vmem:[%s3 + $0x8] sm:$0xf]
    %v210 = vld [vmem:[%s3 + $0xc] sm:$0xf]
    %v211 = vld [vmem:[%s4] sm:$0x1]
    %v212 = vpack.c.bf16 %v192, %v191
    %v213 = vpack.c.bf16 %v194, %v193
    %v214 = vpack.c.bf16 %v196, %v195
    %v215 = vpack.c.bf16 %v198, %v197
    %v216 = vpack.c.bf16 %v200, %v199
    %v217 = vpack.c.bf16 %v202, %v201
    %v218 = vpack.c.bf16 %v204, %v203
    %v219 = vpack.c.bf16 %v206, %v205
    %v221 = vlaneseq
    %v222 = vshrl.u32 %v221, 7
    %v223 = vsub.s32 0, %v222
    %v224 = vrot.slane %v211, %v223
    %v230 = vunpack.c.l.b16 %v207
    %v231 = vunpack.c.l.b16 %v208
    %v232 = vunpack.c.l.b16 %v209
    %v233 = vunpack.c.l.b16 %v210
    %v234 = vpack.c.b16 %v231, %v230
    %v235 = vpack.c.b16 %v233, %v232
    %vm238 = vcmask 261120
    %v240 = vsel %vm238, %v212, 0
    %v243 = vsel %vm238, %v213, 0
    %v246 = vsel %vm238, %v214, 0
    %v249 = vsel %vm238, %v215, 0
    %v252 = vsel %vm238, %v216, 0
    %v255 = vsel %vm238, %v217, 0
    %v258 = vsel %vm238, %v218, 0
    %v261 = vsel %vm238, %v219, 0
    %263 = vmatprep.subr.bf16.mxu0 0
    %264 = vmatpush1.bf16.msra.mxu0 %v234
    %265 = vmatprep.subr.bf16.mxu0 0
    %266 = vmatpush1.bf16.msra.mxu0 %v235
    %267 = vmatprep.subr.bf16.mxu0 0
    %268 = vmatpush1.bf16.msra.mxu0 0
    %269 = vmatprep.subr.bf16.mxu0 0
    %270 = vmatpush1.bf16.msra.mxu0 0
    %271 = vmatprep.subr.bf16.mxu0 0
    %272 = vmatpush1.bf16.msra.mxu0 0
    %273 = vmatprep.subr.bf16.mxu0 0
    %274 = vmatpush1.bf16.msra.mxu0 0
    %275 = vmatprep.subr.bf16.mxu0 0
    %276 = vmatpush1.bf16.msra.mxu0 0
    %277 = vmatprep.subr.bf16.mxu0 0
    %278 = vmatpush1.bf16.msra.mxu0 0
    %279 = vmatprep.subr.bf16.mxu0 0
    %280 = vmatpush1.bf16.msra.mxu0 0
    %281 = vmatprep.subr.bf16.mxu0 0
    %282 = vmatpush1.bf16.msra.mxu0 0
    %283 = vmatprep.subr.bf16.mxu0 0
    %284 = vmatpush1.bf16.msra.mxu0 0
    %285 = vmatprep.subr.bf16.mxu0 0
    %286 = vmatpush1.bf16.msra.mxu0 0
    %287 = vmatprep.subr.bf16.mxu0 0
    %288 = vmatpush1.bf16.msra.mxu0 0
    %289 = vmatprep.subr.bf16.mxu0 0
    %290 = vmatpush1.bf16.msra.mxu0 0
    %291 = vmatprep.subr.bf16.mxu0 0
    %292 = vmatpush1.bf16.msra.mxu0 0
    %293 = vmatprep.subr.bf16.mxu0 0
    %294 = vmatpush1.bf16.msra.mxu0 0
    %295 = vmatprep.mubr.bf16.mxu0 0
    %296 = vmatmul.mubr.bf16.gmra.mrb[0].mxu0 %v240
    %v297 = vpop.f32.mrb[0].mxu0
    %v298 = vadd.f32 %v224, %v297
    %v299 = vpop.f32.mrb[0].mxu0
    %v300 = vpop.f32.mrb[0].mxu0
    %v301 = vadd.f32 %v224, %v300
    %v302 = vpop.f32.mrb[0].mxu0
    %303 = vmatprep.mubr.bf16.mxu0 0
    %304 = vmatmul.mubr.bf16.gmra.mrb[0].mxu0 %v243
    %v305 = vpop.f32.mrb[0].mxu0
    %v306 = vadd.f32 %v224, %v305
    %v307 = vpop.f32.mrb[0].mxu0
    %v308 = vpop.f32.mrb[0].mxu0
    %v309 = vadd.f32 %v224, %v308
    %v310 = vpop.f32.mrb[0].mxu0
    %311 = vmatprep.mubr.bf16.mxu0 0
    %312 = vmatmul.mubr.bf16.gmra.mrb[0].mxu0 %v246
    %v313 = vpop.f32.mrb[0].mxu0
    %v314 = vadd.f32 %v224, %v313
    %v315 = vpop.f32.mrb[0].mxu0
    %v316 = vpop.f32.mrb[0].mxu0
    %v317 = vadd.f32 %v224, %v316
    %v318 = vpop.f32.mrb[0].mxu0
    %319 = vmatprep.mubr.bf16.mxu0 0
    %320 = vmatmul.mubr.bf16.gmra.mrb[0].mxu0 %v249
    %v321 = vpop.f32.mrb[0].mxu0
    %v322 = vadd.f32 %v224, %v321
    %v323 = vpop.f32.mrb[0].mxu0
    %v324 = vpop.f32.mrb[0].mxu0
    %v325 = vadd.f32 %v224, %v324
    %v326 = vpop.f32.mrb[0].mxu0
    %327 = vmatprep.mubr.bf16.mxu0 0
    %328 = vmatmul.mubr.bf16.gmra.mrb[0].mxu0 %v252
    %v329 = vpop.f32.mrb[0].mxu0
    %v330 = vadd.f32 %v224, %v329
    %v331 = vpop.f32.mrb[0].mxu0
    %v332 = vpop.f32.mrb[0].mxu0
    %v333 = vadd.f32 %v224, %v332
    %v334 = vpop.f32.mrb[0].mxu0
    %335 = vmatprep.mubr.bf16.mxu0 0
    %336 = vmatmul.mubr.bf16.gmra.mrb[0].mxu0 %v255
    %v337 = vpop.f32.mrb[0].mxu0
    %v338 = vadd.f32 %v224, %v337
    %v339 = vpop.f32.mrb[0].mxu0
    %v340 = vpop.f32.mrb[0].mxu0
    %v341 = vadd.f32 %v224, %v340
    %v342 = vpop.f32.mrb[0].mxu0
    %343 = vmatprep.mubr.bf16.mxu0 0
    %344 = vmatmul.mubr.bf16.gmra.mrb[0].mxu0 %v258
    %v345 = vpop.f32.mrb[0].mxu0
    %v346 = vadd.f32 %v224, %v345
    %v347 = vpop.f32.mrb[0].mxu0
    %v348 = vpop.f32.mrb[0].mxu0
    %v349 = vadd.f32 %v224, %v348
    %v350 = vpop.f32.mrb[0].mxu0
    %351 = vmatprep.mubr.bf16.mxu0 0
    %352 = vmatmul.mubr.bf16.gmra.mrb[0].mxu0 %v261
    %v353 = vpop.f32.mrb[0].mxu0
    %v354 = vadd.f32 %v224, %v353
    %v355 = vpop.f32.mrb[0].mxu0
    %v356 = vpop.f32.mrb[0].mxu0
    %v357 = vadd.f32 %v224, %v356
    %v358 = vpop.f32.mrb[0].mxu0
    %359 = vdwg.mxu0
    %v360 = vtanh.pop %v298
    %v361 = vtanh.pop %v301
    %v362 = vtanh.pop %v306
    %v363 = vtanh.pop %v309
    %v364 = vtanh.pop %v314
    %v365 = vtanh.pop %v317
    %v366 = vtanh.pop %v322
    %v367 = vtanh.pop %v325
    %v368 = vtanh.pop %v330
    %v369 = vtanh.pop %v333
    %v370 = vtanh.pop %v338
    %v371 = vtanh.pop %v341
    %v372 = vtanh.pop %v346
    %v373 = vtanh.pop %v349
    %v374 = vtanh.pop %v354
    %v375 = vtanh.pop %v357
    %v376 = vld [vmem:[%s5] sm:$0x1]
    %v377 = vld [vmem:[#allocation2] sm:$0x1]
    %v379 = vlaneseq
    %v380 = vshrl.u32 %v379, 7
    %v381 = vsub.s32 0, %v380
    %v382 = vrot.slane %v376, %v381
    %v384 = vmul.f32 %v360, %v382
    %v385 = vmul.f32 %v361, %v382
    %v386 = vmul.f32 %v362, %v382
    %v387 = vmul.f32 %v363, %v382
    %v388 = vmul.f32 %v364, %v382
    %v389 = vmul.f32 %v365, %v382
    %v390 = vmul.f32 %v366, %v382
    %v391 = vmul.f32 %v367, %v382
    %v392 = vmul.f32 %v368, %v382
    %v393 = vmul.f32 %v369, %v382
    %v394 = vmul.f32 %v370, %v382
    %v395 = vmul.f32 %v371, %v382
    %v396 = vmul.f32 %v372, %v382
    %v397 = vmul.f32 %v373, %v382
    %v398 = vmul.f32 %v374, %v382
    %v399 = vmul.f32 %v375, %v382
    %v400 = vsel %vm238, %v384, 0.0
    %401 = vadd.xlane.f32.xlu0 %v400
    %v402 = vpop.xlane.xlu0 %401
    %v403 = vsel %vm238, %v385, 0.0
    %404 = vadd.xlane.f32.xlu0 %v403
    %v405 = vpop.xlane.xlu0 %404
    %v406 = vsel %vm238, %v386, 0.0
    %407 = vadd.xlane.f32.xlu0 %v406
    %v408 = vpop.xlane.xlu0 %407
    %v409 = vsel %vm238, %v387, 0.0
    %410 = vadd.xlane.f32.xlu0 %v409
    %v411 = vpop.xlane.xlu0 %410
    %v412 = vsel %vm238, %v388, 0.0
    %413 = vadd.xlane.f32.xlu0 %v412
    %v414 = vpop.xlane.xlu0 %413
    %v415 = vsel %vm238, %v389, 0.0
    %416 = vadd.xlane.f32.xlu0 %v415
    %v417 = vpop.xlane.xlu0 %416
    %v418 = vsel %vm238, %v390, 0.0
    %419 = vadd.xlane.f32.xlu0 %v418
    %v420 = vpop.xlane.xlu0 %419
    %v421 = vsel %vm238, %v391, 0.0
    %422 = vadd.xlane.f32.xlu0 %v421
    %v423 = vpop.xlane.xlu0 %422
    %v424 = vsel %vm238, %v392, 0.0
    %425 = vadd.xlane.f32.xlu0 %v424
    %v426 = vpop.xlane.xlu0 %425
    %v427 = vsel %vm238, %v393, 0.0
    %428 = vadd.xlane.f32.xlu0 %v427
    %v429 = vpop.xlane.xlu0 %428
    %v430 = vsel %vm238, %v394, 0.0
    %431 = vadd.xlane.f32.xlu0 %v430
    %v432 = vpop.xlane.xlu0 %431
    %v433 = vsel %vm238, %v395, 0.0
    %434 = vadd.xlane.f32.xlu0 %v433
    %v435 = vpop.xlane.xlu0 %434
    %v436 = vsel %vm238, %v396, 0.0
    %437 = vadd.xlane.f32.xlu0 %v436
    %v438 = vpop.xlane.xlu0 %437
    %v439 = vsel %vm238, %v397, 0.0
    %440 = vadd.xlane.f32.xlu0 %v439
    %v441 = vpop.xlane.xlu0 %440
    %v442 = vsel %vm238, %v398, 0.0
    %443 = vadd.xlane.f32.xlu0 %v442
    %v444 = vpop.xlane.xlu0 %443
    %v445 = vsel %vm238, %v399, 0.0
    %446 = vadd.xlane.f32.xlu0 %v445
    %v447 = vpop.xlane.xlu0 %446
    %449 = vset.pattern.permute.xlu0 0
    %450 = vperm.xlu0 %449, %v377
    %v451 = vpop.permute.xlu0 %450
    %v453 = vlaneseq
    %v454 = vshrl.u32 %v453, 7
    %v455 = vsub.s32 0, %v454
    %v456 = vrot.slane %v451, %v455
    %v457 = vadd.f32 %v402, %v456
    %v458 = vadd.f32 %v405, %v456
    %v459 = vadd.f32 %v408, %v456
    %v460 = vadd.f32 %v411, %v456
    %v461 = vadd.f32 %v414, %v456
    %v462 = vadd.f32 %v417, %v456
    %v463 = vadd.f32 %v420, %v456
    %v464 = vadd.f32 %v423, %v456
    %v465 = vadd.f32 %v426, %v456
    %v466 = vadd.f32 %v429, %v456
    %v467 = vadd.f32 %v432, %v456
    %v468 = vadd.f32 %v435, %v456
    %v469 = vadd.f32 %v438, %v456
    %v470 = vadd.f32 %v441, %v456
    %v471 = vadd.f32 %v444, %v456
    %v472 = vadd.f32 %v447, %v456
    %v489 = vlaneseq
    %v490 = vand.u32 %v489, 127
    %v491 = vlaneseq
    %v492 = vshrl.u32 %v491, 7
    %v493 = vsub.s32 %v490, %v492
    %v494 = vrot.slane %v457, %v493
    %v495 = vadd.s32 %v490, 4294967288
    %v496 = vlaneseq
    %v497 = vshrl.u32 %v496, 7
    %v498 = vsub.s32 %v495, %v497
    %v499 = vrot.slane %v458, %v498
    %vm500 = vcmask 130112
    %v501 = vsel %vm500, %v499, %v494
    %v502 = vadd.s32 %v490, 4294967280
    %v503 = vlaneseq
    %v504 = vshrl.u32 %v503, 7
    %v505 = vsub.s32 %v502, %v504
    %v506 = vrot.slane %v459, %v505
    %vm507 = vcmask 195712
    %v508 = vsel %vm507, %v506, %v501
    %v509 = vadd.s32 %v490, 4294967272
    %v510 = vlaneseq
    %v511 = vshrl.u32 %v510, 7
    %v512 = vsub.s32 %v509, %v511
    %v513 = vrot.slane %v460, %v512
    %vm514 = vcmask 261312
    %v515 = vsel %vm514, %v513, %v508
    %v516 = vadd.s32 %v490, 4294967264
    %v517 = vlaneseq
    %v518 = vshrl.u32 %v517, 7
    %v519 = vsub.s32 %v516, %v518
    %v520 = vrot.slane %v461, %v519
    %vm521 = vcmask 326912
    %v522 = vsel %vm521, %v520, %v515
    %v523 = vadd.s32 %v490, 4294967256
    %v524 = vlaneseq
    %v525 = vshrl.u32 %v524, 7
    %v526 = vsub.s32 %v523, %v525
    %v527 = vrot.slane %v462, %v526
    %vm528 = vcmask 392512
    %v529 = vsel %vm528, %v527, %v522
    %v530 = vadd.s32 %v490, 4294967248
    %v531 = vlaneseq
    %v532 = vshrl.u32 %v531, 7
    %v533 = vsub.s32 %v530, %v532
    %v534 = vrot.slane %v463, %v533
    %vm535 = vcmask 458112
    %v536 = vsel %vm535, %v534, %v529
    %v537 = vadd.s32 %v490, 4294967240
    %v538 = vlaneseq
    %v539 = vshrl.u32 %v538, 7
    %v540 = vsub.s32 %v537, %v539
    %v541 = vrot.slane %v464, %v540
    %vm542 = vcmask 523712
    %v543 = vsel %vm542, %v541, %v536
    %v544 = vadd.s32 %v490, 4294967232
    %v545 = vlaneseq
    %v546 = vshrl.u32 %v545, 7
    %v547 = vsub.s32 %v544, %v546
    %v548 = vrot.slane %v465, %v547
    %vm549 = vcmask 589312
    %v550 = vsel %vm549, %v548, %v543
    %v551 = vadd.s32 %v490, 4294967224
    %v552 = vlaneseq
    %v553 = vshrl.u32 %v552, 7
    %v554 = vsub.s32 %v551, %v553
    %v555 = vrot.slane %v466, %v554
    %vm556 = vcmask 654912
    %v557 = vsel %vm556, %v555, %v550
    %v558 = vadd.s32 %v490, 4294967216
    %v559 = vlaneseq
    %v560 = vshrl.u32 %v559, 7
    %v561 = vsub.s32 %v558, %v560
    %v562 = vrot.slane %v467, %v561
    %vm563 = vcmask 720512
    %v564 = vsel %vm563, %v562, %v557
    %v565 = vadd.s32 %v490, 4294967208
    %v566 = vlaneseq
    %v567 = vshrl.u32 %v566, 7
    %v568 = vsub.s32 %v565, %v567
    %v569 = vrot.slane %v468, %v568
    %vm570 = vcmask 786112
    %v571 = vsel %vm570, %v569, %v564
    %v572 = vadd.s32 %v490, 4294967200
    %v573 = vlaneseq
    %v574 = vshrl.u32 %v573, 7
    %v575 = vsub.s32 %v572, %v574
    %v576 = vrot.slane %v469, %v575
    %vm577 = vcmask 851712
    %v578 = vsel %vm577, %v576, %v571
    %v579 = vadd.s32 %v490, 4294967192
    %v580 = vlaneseq
    %v581 = vshrl.u32 %v580, 7
    %v582 = vsub.s32 %v579, %v581
    %v583 = vrot.slane %v470, %v582
    %vm584 = vcmask 917312
    %v585 = vsel %vm584, %v583, %v578
    %v586 = vadd.s32 %v490, 4294967184
    %v587 = vlaneseq
    %v588 = vshrl.u32 %v587, 7
    %v589 = vsub.s32 %v586, %v588
    %v590 = vrot.slane %v471, %v589
    %vm591 = vcmask 982912
    %v592 = vsel %vm591, %v590, %v585
    %v593 = vadd.s32 %v490, 4294967176
    %v594 = vlaneseq
    %v595 = vshrl.u32 %v594, 7
    %v596 = vsub.s32 %v593, %v595
    %v597 = vrot.slane %v472, %v596
    %vm598 = vcmask 1048512
    %v599 = vsel %vm598, %v597, %v592
    %601 = vst [vmem:[#allocation3] sm:$0x1] %v599
    // Predicated region
    $region30: #{tpu_custom_call.1} parent=1 // pred_check
      _
    $region31: #{tpu_custom_call.1} parent=1 // pred_check_branch
      %603 = sbr.rel (0) target = $region33
    $region32: #{tpu_custom_call.1} parent=1 // pred_region
      %s605 = ssub.s32 16, 16
      %606 = vsyncadd [#allocation4], %s605
      %s608 = sshll.u32 [#allocation3], 4
      %s609 = int_to_ptr.vmem [resolvable:$true] %s608
      %611 = dma.vmem_to_hbm [thread:$0]  %s609, 16, %s7, [#allocation4]
    $region33: #{tpu_custom_call.1} parent=1 // pred_fallthru
      _
    // Predicated region
    $region34: #{tpu_custom_call.1} parent=1 // pred_check
      _
    $region35: #{tpu_custom_call.1} parent=1 // pred_check_branch
      %613 = sbr.rel (0) target = $region37
    $region36: #{tpu_custom_call.1} parent=1 // pred_region
      %614 = dma.done [#allocation4], 16
    $region37: #{tpu_custom_call.1} parent=1 // pred_fallthru
      _
    %615 = vsyncpa [#allocation4], 1

// kernel: tpu_custom_call.1
$region0: #{tpu_custom_call.1}
  #allocation0 [shape = 'u32[]', space=smem, size = 0x4, offset = 0x4, fixed_abs, tag = 'smem constant byte address 0x4 - core index']
  #allocation1 [shape = 'u32[144,128]{1,0:T(1,128)}', space=vmem, size = 0x12000, scoped, tag = 'internal scratch']
  #allocation2 [shape = 'f32[1,1]{1,0:T(1,128)S(1)}', space=vmem, size = 0x200, scoped, tag = 'scoped memory for tpu_custom_call.1']
  %s0 = inlined_call_operand.vmem [shape: f32[128,16], index: 0, kind: input, shape index: {}]
  %s1 = inlined_call_operand.vmem [shape: bf16[16,32], index: 1, kind: input, shape index: {}]
  %s2 = inlined_call_operand.vmem [shape: f32[1,32], index: 2, kind: input, shape index: {}]
  %s3 = inlined_call_operand.vmem [shape: bf16[32,32], index: 3, kind: input, shape index: {}]
  %s4 = inlined_call_operand.vmem [shape: f32[1,32], index: 4, kind: input, shape index: {}]
  %s5 = inlined_call_operand.vmem [shape: f32[1,32], index: 5, kind: input, shape index: {}]
  %s6 = inlined_call_operand.<no memory space> [shape: f32[1,1], index: 6, kind: input, shape index: {}]
  %s7 = inlined_call_operand.hbm [shape: f32[1,128], index: 7, kind: output, shape index: {}]
  %s8 = sld [smem:[#allocation0]]
  $region38: #{tpu_custom_call.1} parent=0
    _
  %s10 = ssub.s32 1, %s8
  %s11 = scalar_select 0, %s10, %s8
  %v12 = vstv %s6
  %13 = vst [vmem:[#allocation2] sm:$0x1] %v12
  $region1: #{tpu_custom_call.1} parent=0
    #allocation3 [shape = 'u8[512]{0}', space=vmem, size = 0x400, scoped, tag = 'output window, operand 0, single buffered']
    #allocation4 [shape = 's32[1]{0}', space=sflag, size = 0x4, scoped, tag = 'scoped memory for tpu_custom_call.1']
    %14 = vsyncpa [#allocation4], 0
    // Predicated region
    $region2: #{tpu_custom_call.1} parent=1 // pred_check
      _
    $region3: #{tpu_custom_call.1} parent=1 // pred_check_branch
      %16 = sbr.rel (0) target = $region5
    $region4: #{tpu_custom_call.1} parent=1 // pred_region
      _
    $region5: #{tpu_custom_call.1} parent=1 // pred_fallthru
      _
    // Predicated region
    $region6: #{tpu_custom_call.1} parent=1 // pred_check
      _
    $region7: #{tpu_custom_call.1} parent=1 // pred_check_branch
      %18 = sbr.rel (0) target = $region9
    $region8: #{tpu_custom_call.1} parent=1 // pred_region
      _
    $region9: #{tpu_custom_call.1} parent=1 // pred_fallthru
      _
    // Predicated region
    $region10: #{tpu_custom_call.1} parent=1 // pred_check
      _
    $region11: #{tpu_custom_call.1} parent=1 // pred_check_branch
      %20 = sbr.rel (0) target = $region13
    $region12: #{tpu_custom_call.1} parent=1 // pred_region
      _
    $region13: #{tpu_custom_call.1} parent=1 // pred_fallthru
      _
    // Predicated region
    $region14: #{tpu_custom_call.1} parent=1 // pred_check
      _
    $region15: #{tpu_custom_call.1} parent=1 // pred_check_branch
      %22 = sbr.rel (0) target = $region17
    $region16: #{tpu_custom_call.1} parent=1 // pred_region
      _
    $region17: #{tpu_custom_call.1} parent=1 // pred_fallthru
      _
    // Predicated region
    $region18: #{tpu_custom_call.1} parent=1 // pred_check
      _
    $region19: #{tpu_custom_call.1} parent=1 // pred_check_branch
      %24 = sbr.rel (0) target = $region21
    $region20: #{tpu_custom_call.1} parent=1 // pred_region
      _
    $region21: #{tpu_custom_call.1} parent=1 // pred_fallthru
      _
    // Predicated region
    $region22: #{tpu_custom_call.1} parent=1 // pred_check
      _
    $region23: #{tpu_custom_call.1} parent=1 // pred_check_branch
      %26 = sbr.rel (0) target = $region25
    $region24: #{tpu_custom_call.1} parent=1 // pred_region
      _
    $region25: #{tpu_custom_call.1} parent=1 // pred_fallthru
      _
    // Predicated region
    $region26: #{tpu_custom_call.1} parent=1 // pred_check
      _
    $region27: #{tpu_custom_call.1} parent=1 // pred_check_branch
      %28 = sbr.rel (0) target = $region29
    $region28: #{tpu_custom_call.1} parent=1 // pred_region
      _
    $region29: #{tpu_custom_call.1} parent=1 // pred_fallthru
      _
    %v30 = vld [vmem:[%s0] sm:$0xff]
    %v31 = vld [vmem:[%s0 + $0x8] sm:$0xff]
    %v32 = vld [vmem:[%s0 + $0x10] sm:$0xff]
    %v33 = vld [vmem:[%s0 + $0x18] sm:$0xff]
    %v34 = vld [vmem:[%s0 + $0x20] sm:$0xff]
    %v35 = vld [vmem:[%s0 + $0x28] sm:$0xff]
    %v36 = vld [vmem:[%s0 + $0x30] sm:$0xff]
    %v37 = vld [vmem:[%s0 + $0x38] sm:$0xff]
    %v38 = vld [vmem:[%s0 + $0x40] sm:$0xff]
    %v39 = vld [vmem:[%s0 + $0x48] sm:$0xff]
    %v40 = vld [vmem:[%s0 + $0x50] sm:$0xff]
    %v41 = vld [vmem:[%s0 + $0x58] sm:$0xff]
    %v42 = vld [vmem:[%s0 + $0x60] sm:$0xff]
    %v43 = vld [vmem:[%s0 + $0x68] sm:$0xff]
    %v44 = vld [vmem:[%s0 + $0x70] sm:$0xff]
    %v45 = vld [vmem:[%s0 + $0x78] sm:$0xff]
    %v46 = vld [vmem:[%s1] sm:$0xf]
    %v47 = vld [vmem:[%s1 + $0x4] sm:$0xf]
    %v48 = vld [vmem:[%s2] sm:$0x1]
    %v49 = vpack.c.bf16 %v31, %v30
    %v50 = vpack.c.bf16 %v33, %v32
    %v51 = vpack.c.bf16 %v35, %v34
    %v52 = vpack.c.bf16 %v37, %v36
    %v53 = vpack.c.bf16 %v39, %v38
    %v54 = vpack.c.bf16 %v41, %v40
    %v55 = vpack.c.bf16 %v43, %v42
    %v56 = vpack.c.bf16 %v45, %v44
    %v58 = vlaneseq
    %v59 = vshrl.u32 %v58, 7
    %v60 = vsub.s32 0, %v59
    %v61 = vrot.slane %v48, %v60
    %v65 = vunpack.c.l.b16 %v46
    %v66 = vunpack.c.l.b16 %v47
    %v67 = vpack.c.b16 %v66, %v65
    %vm69 = vcmask 130048
    %v71 = vsel %vm69, %v49, 0
    %v74 = vsel %vm69, %v50, 0
    %v77 = vsel %vm69, %v51, 0
    %v80 = vsel %vm69, %v52, 0
    %v83 = vsel %vm69, %v53, 0
    %v86 = vsel %vm69, %v54, 0
    %v89 = vsel %vm69, %v55, 0
    %v92 = vsel %vm69, %v56, 0
    %94 = vmatprep.subr.bf16.mxu0 0
    %95 = vmatpush1.bf16.msra.mxu0 %v67
    %96 = vmatprep.subr.bf16.mxu0 0
    %97 = vmatpush1.bf16.msra.mxu0 0
    %98 = vmatprep.subr.bf16.mxu0 0
    %99 = vmatpush1.bf16.msra.mxu0 0
    %100 = vmatprep.subr.bf16.mxu0 0
    %101 = vmatpush1.bf16.msra.mxu0 0
    %102 = vmatprep.subr.bf16.mxu0 0
    %103 = vmatpush1.bf16.msra.mxu0 0
    %104 = vmatprep.subr.bf16.mxu0 0
    %105 = vmatpush1.bf16.msra.mxu0 0
    %106 = vmatprep.subr.bf16.mxu0 0
    %107 = vmatpush1.bf16.msra.mxu0 0
    %108 = vmatprep.subr.bf16.mxu0 0
    %109 = vmatpush1.bf16.msra.mxu0 0
    %110 = vmatprep.subr.bf16.mxu0 0
    %111 = vmatpush1.bf16.msra.mxu0 0
    %112 = vmatprep.subr.bf16.mxu0 0
    %113 = vmatpush1.bf16.msra.mxu0 0
    %114 = vmatprep.subr.bf16.mxu0 0
    %115 = vmatpush1.bf16.msra.mxu0 0
    %116 = vmatprep.subr.bf16.mxu0 0
    %117 = vmatpush1.bf16.msra.mxu0 0
    %118 = vmatprep.subr.bf16.mxu0 0
    %119 = vmatpush1.bf16.msra.mxu0 0
    %120 = vmatprep.subr.bf16.mxu0 0
    %121 = vmatpush1.bf16.msra.mxu0 0
    %122 = vmatprep.subr.bf16.mxu0 0
    %123 = vmatpush1.bf16.msra.mxu0 0
    %124 = vmatprep.subr.bf16.mxu0 0
    %125 = vmatpush1.bf16.msra.mxu0 0
    %126 = vmatprep.mubr.bf16.mxu0 0
    %127 = vmatmul.mubr.bf16.gmra.mrb[0].mxu0 %v71
    %v128 = vpop.f32.mrb[0].mxu0
    %v129 = vadd.f32 %v61, %v128
    %v130 = vpop.f32.mrb[0].mxu0
    %v131 = vpop.f32.mrb[0].mxu0
    %v132 = vadd.f32 %v61, %v131
    %v133 = vpop.f32.mrb[0].mxu0
    %134 = vmatprep.mubr.bf16.mxu0 0
    %135 = vmatmul.mubr.bf16.gmra.mrb[0].mxu0 %v74
    %v136 = vpop.f32.mrb[0].mxu0
    %v137 = vadd.f32 %v61, %v136
    %v138 = vpop.f32.mrb[0].mxu0
    %v139 = vpop.f32.mrb[0].mxu0
    %v140 = vadd.f32 %v61, %v139
    %v141 = vpop.f32.mrb[0].mxu0
    %142 = vmatprep.mubr.bf16.mxu0 0
    %143 = vmatmul.mubr.bf16.gmra.mrb[0].mxu0 %v77
    %v144 = vpop.f32.mrb[0].mxu0
    %v145 = vadd.f32 %v61, %v144
    %v146 = vpop.f32.mrb[0].mxu0
    %v147 = vpop.f32.mrb[0].mxu0
    %v148 = vadd.f32 %v61, %v147
    %v149 = vpop.f32.mrb[0].mxu0
    %150 = vmatprep.mubr.bf16.mxu0 0
    %151 = vmatmul.mubr.bf16.gmra.mrb[0].mxu0 %v80
    %v152 = vpop.f32.mrb[0].mxu0
    %v153 = vadd.f32 %v61, %v152
    %v154 = vpop.f32.mrb[0].mxu0
    %v155 = vpop.f32.mrb[0].mxu0
    %v156 = vadd.f32 %v61, %v155
    %v157 = vpop.f32.mrb[0].mxu0
    %158 = vmatprep.mubr.bf16.mxu0 0
    %159 = vmatmul.mubr.bf16.gmra.mrb[0].mxu0 %v83
    %v160 = vpop.f32.mrb[0].mxu0
    %v161 = vadd.f32 %v61, %v160
    %v162 = vpop.f32.mrb[0].mxu0
    %v163 = vpop.f32.mrb[0].mxu0
    %v164 = vadd.f32 %v61, %v163
    %v165 = vpop.f32.mrb[0].mxu0
    %166 = vmatprep.mubr.bf16.mxu0 0
    %167 = vmatmul.mubr.bf16.gmra.mrb[0].mxu0 %v86
    %v168 = vpop.f32.mrb[0].mxu0
    %v169 = vadd.f32 %v61, %v168
    %v170 = vpop.f32.mrb[0].mxu0
    %v171 = vpop.f32.mrb[0].mxu0
    %v172 = vadd.f32 %v61, %v171
    %v173 = vpop.f32.mrb[0].mxu0
    %174 = vmatprep.mubr.bf16.mxu0 0
    %175 = vmatmul.mubr.bf16.gmra.mrb[0].mxu0 %v89
    %v176 = vpop.f32.mrb[0].mxu0
    %v177 = vadd.f32 %v61, %v176
    %v178 = vpop.f32.mrb[0].mxu0
    %v179 = vpop.f32.mrb[0].mxu0
    %v180 = vadd.f32 %v61, %v179
    %v181 = vpop.f32.mrb[0].mxu0
    %182 = vmatprep.mubr.bf16.mxu0 0
    %183 = vmatmul.mubr.bf16.gmra.mrb[0].mxu0 %v92
    %v184 = vpop.f32.mrb[0].mxu0
    %v185 = vadd.f32 %v61, %v184
    %v186 = vpop.f32.mrb[0].mxu0
    %v187 = vpop.f32.mrb[0].mxu0
    %v188 = vadd.f32 %v61, %v187
    %v189 = vpop.f32.mrb[0].mxu0
    %190 = vdwg.mxu0
    %v191 = vtanh.pop %v129
    %v192 = vtanh.pop %v132
    %v193 = vtanh.pop %v137
    %v194 = vtanh.pop %v140
    %v195 = vtanh.pop %v145
    %v196 = vtanh.pop %v148
    %v197 = vtanh.pop %v153
    %v198 = vtanh.pop %v156
    %v199 = vtanh.pop %v161
    %v200 = vtanh.pop %v164
    %v201 = vtanh.pop %v169
    %v202 = vtanh.pop %v172
    %v203 = vtanh.pop %v177
    %v204 = vtanh.pop %v180
    %v205 = vtanh.pop %v185
    %v206 = vtanh.pop %v188
    %v207 = vld [vmem:[%s3] sm:$0xf]
    %v208 = vld [vmem:[%s3 + $0x4] sm:$0xf]
    %v209 = vld [vmem:[%s3 + $0x8] sm:$0xf]
    %v210 = vld [vmem:[%s3 + $0xc] sm:$0xf]
    %v211 = vld [vmem:[%s4] sm:$0x1]
    %v212 = vpack.c.bf16 %v192, %v191
    %v213 = vpack.c.bf16 %v194, %v193
    %v214 = vpack.c.bf16 %v196, %v195
    %v215 = vpack.c.bf16 %v198, %v197
    %v216 = vpack.c.bf16 %v200, %v199
    %v217 = vpack.c.bf16 %v202, %v201
    %v218 = vpack.c.bf16 %v204, %v203
    %v219 = vpack.c.bf16 %v206, %v205
    %v221 = vlaneseq
    %v222 = vshrl.u32 %v221, 7
    %v223 = vsub.s32 0, %v222
    %v224 = vrot.slane %v211, %v223
    %v230 = vunpack.c.l.b16 %v207
    %v231 = vunpack.c.l.b16 %v208
    %v232 = vunpack.c.l.b16 %v209
    %v233 = vunpack.c.l.b16 %v210
    %v234 = vpack.c.b16 %v231, %v230
    %v235 = vpack.c.b16 %v233, %v232
    %vm238 = vcmask 261120
    %v240 = vsel %vm238, %v212, 0
    %v243 = vsel %vm238, %v213, 0
    %v246 = vsel %vm238, %v214, 0
    %v249 = vsel %vm238, %v215, 0
    %v252 = vsel %vm238, %v216, 0
    %v255 = vsel %vm238, %v217, 0
    %v258 = vsel %vm238, %v218, 0
    %v261 = vsel %vm238, %v219, 0
    %263 = vmatprep.subr.bf16.mxu0 0
    %264 = vmatpush1.bf16.msra.mxu0 %v234
    %265 = vmatprep.subr.bf16.mxu0 0
    %266 = vmatpush1.bf16.msra.mxu0 %v235
    %267 = vmatprep.subr.bf16.mxu0 0
    %268 = vmatpush1.bf16.msra.mxu0 0
    %269 = vmatprep.subr.bf16.mxu0 0
    %270 = vmatpush1.bf16.msra.mxu0 0
    %271 = vmatprep.subr.bf16.mxu0 0
    %272 = vmatpush1.bf16.msra.mxu0 0
    %273 = vmatprep.subr.bf16.mxu0 0
    %274 = vmatpush1.bf16.msra.mxu0 0
    %275 = vmatprep.subr.bf16.mxu0 0
    %276 = vmatpush1.bf16.msra.mxu0 0
    %277 = vmatprep.subr.bf16.mxu0 0
    %278 = vmatpush1.bf16.msra.mxu0 0
    %279 = vmatprep.subr.bf16.mxu0 0
    %280 = vmatpush1.bf16.msra.mxu0 0
    %281 = vmatprep.subr.bf16.mxu0 0
    %282 = vmatpush1.bf16.msra.mxu0 0
    %283 = vmatprep.subr.bf16.mxu0 0
    %284 = vmatpush1.bf16.msra.mxu0 0
    %285 = vmatprep.subr.bf16.mxu0 0
    %286 = vmatpush1.bf16.msra.mxu0 0
    %287 = vmatprep.subr.bf16.mxu0 0
    %288 = vmatpush1.bf16.msra.mxu0 0
    %289 = vmatprep.subr.bf16.mxu0 0
    %290 = vmatpush1.bf16.msra.mxu0 0
    %291 = vmatprep.subr.bf16.mxu0 0
    %292 = vmatpush1.bf16.msra.mxu0 0
    %293 = vmatprep.subr.bf16.mxu0 0
    %294 = vmatpush1.bf16.msra.mxu0 0
    %295 = vmatprep.mubr.bf16.mxu0 0
    %296 = vmatmul.mubr.bf16.gmra.mrb[0].mxu0 %v240
    %v297 = vpop.f32.mrb[0].mxu0
    %v298 = vadd.f32 %v224, %v297
    %v299 = vpop.f32.mrb[0].mxu0
    %v300 = vpop.f32.mrb[0].mxu0
    %v301 = vadd.f32 %v224, %v300
    %v302 = vpop.f32.mrb[0].mxu0
    %303 = vmatprep.mubr.bf16.mxu0 0
    %304 = vmatmul.mubr.bf16.gmra.mrb[0].mxu0 %v243
    %v305 = vpop.f32.mrb[0].mxu0
    %v306 = vadd.f32 %v224, %v305
    %v307 = vpop.f32.mrb[0].mxu0
    %v308 = vpop.f32.mrb[0].mxu0
    %v309 = vadd.f32 %v224, %v308
    %v310 = vpop.f32.mrb[0].mxu0
    %311 = vmatprep.mubr.bf16.mxu0 0
    %312 = vmatmul.mubr.bf16.gmra.mrb[0].mxu0 %v246
    %v313 = vpop.f32.mrb[0].mxu0
    %v314 = vadd.f32 %v224, %v313
    %v315 = vpop.f32.mrb[0].mxu0
    %v316 = vpop.f32.mrb[0].mxu0
    %v317 = vadd.f32 %v224, %v316
    %v318 = vpop.f32.mrb[0].mxu0
    %319 = vmatprep.mubr.bf16.mxu0 0
    %320 = vmatmul.mubr.bf16.gmra.mrb[0].mxu0 %v249
    %v321 = vpop.f32.mrb[0].mxu0
    %v322 = vadd.f32 %v224, %v321
    %v323 = vpop.f32.mrb[0].mxu0
    %v324 = vpop.f32.mrb[0].mxu0
    %v325 = vadd.f32 %v224, %v324
    %v326 = vpop.f32.mrb[0].mxu0
    %327 = vmatprep.mubr.bf16.mxu0 0
    %328 = vmatmul.mubr.bf16.gmra.mrb[0].mxu0 %v252
    %v329 = vpop.f32.mrb[0].mxu0
    %v330 = vadd.f32 %v224, %v329
    %v331 = vpop.f32.mrb[0].mxu0
    %v332 = vpop.f32.mrb[0].mxu0
    %v333 = vadd.f32 %v224, %v332
    %v334 = vpop.f32.mrb[0].mxu0
    %335 = vmatprep.mubr.bf16.mxu0 0
    %336 = vmatmul.mubr.bf16.gmra.mrb[0].mxu0 %v255
    %v337 = vpop.f32.mrb[0].mxu0
    %v338 = vadd.f32 %v224, %v337
    %v339 = vpop.f32.mrb[0].mxu0
    %v340 = vpop.f32.mrb[0].mxu0
    %v341 = vadd.f32 %v224, %v340
    %v342 = vpop.f32.mrb[0].mxu0
    %343 = vmatprep.mubr.bf16.mxu0 0
    %344 = vmatmul.mubr.bf16.gmra.mrb[0].mxu0 %v258
    %v345 = vpop.f32.mrb[0].mxu0
    %v346 = vadd.f32 %v224, %v345
    %v347 = vpop.f32.mrb[0].mxu0
    %v348 = vpop.f32.mrb[0].mxu0
    %v349 = vadd.f32 %v224, %v348
    %v350 = vpop.f32.mrb[0].mxu0
    %351 = vmatprep.mubr.bf16.mxu0 0
    %352 = vmatmul.mubr.bf16.gmra.mrb[0].mxu0 %v261
    %v353 = vpop.f32.mrb[0].mxu0
    %v354 = vadd.f32 %v224, %v353
    %v355 = vpop.f32.mrb[0].mxu0
    %v356 = vpop.f32.mrb[0].mxu0
    %v357 = vadd.f32 %v224, %v356
    %v358 = vpop.f32.mrb[0].mxu0
    %359 = vdwg.mxu0
    %v360 = vtanh.pop %v298
    %v361 = vtanh.pop %v301
    %v362 = vtanh.pop %v306
    %v363 = vtanh.pop %v309
    %v364 = vtanh.pop %v314
    %v365 = vtanh.pop %v317
    %v366 = vtanh.pop %v322
    %v367 = vtanh.pop %v325
    %v368 = vtanh.pop %v330
    %v369 = vtanh.pop %v333
    %v370 = vtanh.pop %v338
    %v371 = vtanh.pop %v341
    %v372 = vtanh.pop %v346
    %v373 = vtanh.pop %v349
    %v374 = vtanh.pop %v354
    %v375 = vtanh.pop %v357
    %v376 = vld [vmem:[%s5] sm:$0x1]
    %v377 = vld [vmem:[#allocation2] sm:$0x1]
    %v379 = vlaneseq
    %v380 = vshrl.u32 %v379, 7
    %v381 = vsub.s32 0, %v380
    %v382 = vrot.slane %v376, %v381
    %v384 = vmul.f32 %v360, %v382
    %v385 = vmul.f32 %v361, %v382
    %v386 = vmul.f32 %v362, %v382
    %v387 = vmul.f32 %v363, %v382
    %v388 = vmul.f32 %v364, %v382
    %v389 = vmul.f32 %v365, %v382
    %v390 = vmul.f32 %v366, %v382
    %v391 = vmul.f32 %v367, %v382
    %v392 = vmul.f32 %v368, %v382
    %v393 = vmul.f32 %v369, %v382
    %v394 = vmul.f32 %v370, %v382
    %v395 = vmul.f32 %v371, %v382
    %v396 = vmul.f32 %v372, %v382
    %v397 = vmul.f32 %v373, %v382
    %v398 = vmul.f32 %v374, %v382
    %v399 = vmul.f32 %v375, %v382
    %v400 = vsel %vm238, %v384, 0.0
    %401 = vadd.xlane.f32.xlu0 %v400
    %v402 = vpop.xlane.xlu0 %401
    %v403 = vsel %vm238, %v385, 0.0
    %404 = vadd.xlane.f32.xlu0 %v403
    %v405 = vpop.xlane.xlu0 %404
    %v406 = vsel %vm238, %v386, 0.0
    %407 = vadd.xlane.f32.xlu0 %v406
    %v408 = vpop.xlane.xlu0 %407
    %v409 = vsel %vm238, %v387, 0.0
    %410 = vadd.xlane.f32.xlu0 %v409
    %v411 = vpop.xlane.xlu0 %410
    %v412 = vsel %vm238, %v388, 0.0
    %413 = vadd.xlane.f32.xlu0 %v412
    %v414 = vpop.xlane.xlu0 %413
    %v415 = vsel %vm238, %v389, 0.0
    %416 = vadd.xlane.f32.xlu0 %v415
    %v417 = vpop.xlane.xlu0 %416
    %v418 = vsel %vm238, %v390, 0.0
    %419 = vadd.xlane.f32.xlu0 %v418
    %v420 = vpop.xlane.xlu0 %419
    %v421 = vsel %vm238, %v391, 0.0
    %422 = vadd.xlane.f32.xlu0 %v421
    %v423 = vpop.xlane.xlu0 %422
    %v424 = vsel %vm238, %v392, 0.0
    %425 = vadd.xlane.f32.xlu0 %v424
    %v426 = vpop.xlane.xlu0 %425
    %v427 = vsel %vm238, %v393, 0.0
    %428 = vadd.xlane.f32.xlu0 %v427
    %v429 = vpop.xlane.xlu0 %428
    %v430 = vsel %vm238, %v394, 0.0
    %431 = vadd.xlane.f32.xlu0 %v430
    %v432 = vpop.xlane.xlu0 %431
    %v433 = vsel %vm238, %v395, 0.0
    %434 = vadd.xlane.f32.xlu0 %v433
    %v435 = vpop.xlane.xlu0 %434
    %v436 = vsel %vm238, %v396, 0.0
    %437 = vadd.xlane.f32.xlu0 %v436
    %v438 = vpop.xlane.xlu0 %437
    %v439 = vsel %vm238, %v397, 0.0
    %440 = vadd.xlane.f32.xlu0 %v439
    %v441 = vpop.xlane.xlu0 %440
    %v442 = vsel %vm238, %v398, 0.0
    %443 = vadd.xlane.f32.xlu0 %v442
    %v444 = vpop.xlane.xlu0 %443
    %v445 = vsel %vm238, %v399, 0.0
    %446 = vadd.xlane.f32.xlu0 %v445
    %v447 = vpop.xlane.xlu0 %446
    %449 = vset.pattern.permute.xlu0 0
    %450 = vperm.xlu0 %449, %v377
    %v451 = vpop.permute.xlu0 %450
    %v453 = vlaneseq
    %v454 = vshrl.u32 %v453, 7
    %v455 = vsub.s32 0, %v454
    %v456 = vrot.slane %v451, %v455
    %v457 = vadd.f32 %v402, %v456
    %v458 = vadd.f32 %v405, %v456
    %v459 = vadd.f32 %v408, %v456
    %v460 = vadd.f32 %v411, %v456
    %v461 = vadd.f32 %v414, %v456
    %v462 = vadd.f32 %v417, %v456
    %v463 = vadd.f32 %v420, %v456
    %v464 = vadd.f32 %v423, %v456
    %v465 = vadd.f32 %v426, %v456
    %v466 = vadd.f32 %v429, %v456
    %v467 = vadd.f32 %v432, %v456
    %v468 = vadd.f32 %v435, %v456
    %v469 = vadd.f32 %v438, %v456
    %v470 = vadd.f32 %v441, %v456
    %v471 = vadd.f32 %v444, %v456
    %v472 = vadd.f32 %v447, %v456
    %v489 = vlaneseq
    %v490 = vand.u32 %v489, 127
    %v491 = vlaneseq
    %v492 = vshrl.u32 %v491, 7
    %v493 = vsub.s32 %v490, %v492
    %v494 = vrot.slane %v457, %v493
    %v495 = vadd.s32 %v490, 4294967288
    %v496 = vlaneseq
    %v497 = vshrl.u32 %v496, 7
    %v498 = vsub.s32 %v495, %v497
    %v499 = vrot.slane %v458, %v498
    %vm500 = vcmask 130112
    %v501 = vsel %vm500, %v499, %v494
    %v502 = vadd.s32 %v490, 4294967280
    %v503 = vlaneseq
    %v504 = vshrl.u32 %v503, 7
    %v505 = vsub.s32 %v502, %v504
    %v506 = vrot.slane %v459, %v505
    %vm507 = vcmask 195712
    %v508 = vsel %vm507, %v506, %v501
    %v509 = vadd.s32 %v490, 4294967272
    %v510 = vlaneseq
    %v511 = vshrl.u32 %v510, 7
    %v512 = vsub.s32 %v509, %v511
    %v513 = vrot.slane %v460, %v512
    %vm514 = vcmask 261312
    %v515 = vsel %vm514, %v513, %v508
    %v516 = vadd.s32 %v490, 4294967264
    %v517 = vlaneseq
    %v518 = vshrl.u32 %v517, 7
    %v519 = vsub.s32 %v516, %v518
    %v520 = vrot.slane %v461, %v519
    %vm521 = vcmask 326912
    %v522 = vsel %vm521, %v520, %v515
    %v523 = vadd.s32 %v490, 4294967256
    %v524 = vlaneseq
    %v525 = vshrl.u32 %v524, 7
    %v526 = vsub.s32 %v523, %v525
    %v527 = vrot.slane %v462, %v526
    %vm528 = vcmask 392512
    %v529 = vsel %vm528, %v527, %v522
    %v530 = vadd.s32 %v490, 4294967248
    %v531 = vlaneseq
    %v532 = vshrl.u32 %v531, 7
    %v533 = vsub.s32 %v530, %v532
    %v534 = vrot.slane %v463, %v533
    %vm535 = vcmask 458112
    %v536 = vsel %vm535, %v534, %v529
    %v537 = vadd.s32 %v490, 4294967240
    %v538 = vlaneseq
    %v539 = vshrl.u32 %v538, 7
    %v540 = vsub.s32 %v537, %v539
    %v541 = vrot.slane %v464, %v540
    %vm542 = vcmask 523712
    %v543 = vsel %vm542, %v541, %v536
    %v544 = vadd.s32 %v490, 4294967232
    %v545 = vlaneseq
    %v546 = vshrl.u32 %v545, 7
    %v547 = vsub.s32 %v544, %v546
    %v548 = vrot.slane %v465, %v547
    %vm549 = vcmask 589312
    %v550 = vsel %vm549, %v548, %v543
    %v551 = vadd.s32 %v490, 4294967224
    %v552 = vlaneseq
    %v553 = vshrl.u32 %v552, 7
    %v554 = vsub.s32 %v551, %v553
    %v555 = vrot.slane %v466, %v554
    %vm556 = vcmask 654912
    %v557 = vsel %vm556, %v555, %v550
    %v558 = vadd.s32 %v490, 4294967216
    %v559 = vlaneseq
    %v560 = vshrl.u32 %v559, 7
    %v561 = vsub.s32 %v558, %v560
    %v562 = vrot.slane %v467, %v561
    %vm563 = vcmask 720512
    %v564 = vsel %vm563, %v562, %v557
    %v565 = vadd.s32 %v490, 4294967208
    %v566 = vlaneseq
    %v567 = vshrl.u32 %v566, 7
    %v568 = vsub.s32 %v565, %v567
    %v569 = vrot.slane %v468, %v568
    %vm570 = vcmask 786112
    %v571 = vsel %vm570, %v569, %v564
    %v572 = vadd.s32 %v490, 4294967200
    %v573 = vlaneseq
    %v574 = vshrl.u32 %v573, 7
    %v575 = vsub.s32 %v572, %v574
    %v576 = vrot.slane %v469, %v575
    %vm577 = vcmask 851712
    %v578 = vsel %vm577, %v576, %v571
    %v579 = vadd.s32 %v490, 4294967192
    %v580 = vlaneseq
    %v581 = vshrl.u32 %v580, 7
    %v582 = vsub.s32 %v579, %v581
    %v583 = vrot.slane %v470, %v582
    %vm584 = vcmask 917312
    %v585 = vsel %vm584, %v583, %v578
    %v586 = vadd.s32 %v490, 4294967184
    %v587 = vlaneseq
    %v588 = vshrl.u32 %v587, 7
    %v589 = vsub.s32 %v586, %v588
    %v590 = vrot.slane %v471, %v589
    %vm591 = vcmask 982912
    %v592 = vsel %vm591, %v590, %v585
    %v593 = vadd.s32 %v490, 4294967176
    %v594 = vlaneseq
    %v595 = vshrl.u32 %v594, 7
    %v596 = vsub.s32 %v593, %v595
    %v597 = vrot.slane %v472, %v596
    %vm598 = vcmask 1048512
    %v599 = vsel %vm598, %v597, %v592
    %601 = vst [vmem:[#allocation3] sm:$0x1] %v599
    // Predicated region
    $region30: #{tpu_custom_call.1} parent=1 // pred_check
      _
    $region31: #{tpu_custom_call.1} parent=1 // pred_check_branch
      %603 = sbr.rel (0) target = $region33
    $region32: #{tpu_custom_call.1} parent=1 // pred_region
      %s605 = ssub.s32 16, 16
      %606 = vsyncadd [#allocation4], %s605
      %s608 = sshll.u32 [#allocation3], 4
      %s609 = int_to_ptr.vmem [resolvable:$true] %s608
      %611 = dma.vmem_to_hbm [thread:$0]  %s609, 16, %s7, [#allocation4]
    $region33: #{tpu_custom_call.1} parent=1 // pred_fallthru
      _
    // Predicated region
    $region34: #{tpu_custom_call.1} parent=1 // pred_check
      _
    $region35: #{tpu_custom_call.1} parent=1 // pred_check_branch
      %613 = sbr.rel (0) target = $region37
    $region36: #{tpu_custom_call.1} parent=1 // pred_region
      %614 = dma.done [#allocation4], 16
    $region37: #{tpu_custom_call.1} parent=1 // pred_fallthru
      _
    %615 = vsyncpa [#allocation4], 1

</llo_original>
